<compile_context>
chip_gen: v5e
topology: v5e:2x2
jax: 0.10.0
libtpu: 0.0.40
codegen_flags: <defaults>
</compile_context>

<pallas_src>
import jax
import jax.numpy as jnp
from jax.experimental import pallas as pl
from jax.experimental.pallas import tpu as pltpu


def crd_loss_kernel(inv_t_ref, s_ref, t_ref, ws_ref, bs_ref, wt_ref, bt_ref,
                    out_ref):
    f32 = jnp.float32
    bf16 = jnp.bfloat16

    B, DS = s_ref.shape
    _, DT = t_ref.shape
    OUT = ws_ref.shape[1]

    # ---- both projection heads in ONE block-diagonal MXU push ----
    #   x = [[s, 0], [0, t]]  : (2B, DS+DT)
    #   w = [Ws; Wt]          : (DS+DT, OUT)
    s_pad = jnp.concatenate([s_ref[...], jnp.zeros((B, DT), f32)], axis=1)
    t_pad = jnp.concatenate([jnp.zeros((B, DS), f32), t_ref[...]], axis=1)
    x = jnp.concatenate([s_pad, t_pad], axis=0).astype(bf16)          # (2B, K)
    w = jnp.concatenate([ws_ref[...], wt_ref[...]], axis=0).astype(bf16)

    emb = jnp.dot(x, w, preferred_element_type=f32)                   # (2B, OUT)
    bias = jnp.concatenate([jnp.broadcast_to(bs_ref[...], (B, OUT)),
                            jnp.broadcast_to(bt_ref[...], (B, OUT))], axis=0)
    emb = emb + bias

    # ---- norm_feats on the whole (2B, OUT) slab (rsqrt -> EUP slot) ----
    # eps only guards degenerate all-zero rows; no effect on normal inputs.
    n = emb * jax.lax.rsqrt(
        jnp.sum(emb * emb, axis=1, keepdims=True) + 1e-12)            # f32
    n_b = n.astype(bf16)
    s_nb, t_nb = n_b[:B], n_b[B:]

    inv_t = inv_t_ref[0]

    # ---- similarity logits: s @ t.T without materialising a transpose ----
    # inv_t applied post-matmul: B < OUT here so the B*B pass is the cheaper one.
    logits = jax.lax.dot_general(
        s_nb, t_nb, (((1,), (1,)), ((), ())),
        preferred_element_type=f32) * inv_t                           # (B, B)

    # diag(logits) == diag(logits.T): one f32 lane reduction, no bf16 round-trip.
    diag = jnp.sum(n[:B] * n[B:], axis=1, keepdims=True) * inv_t      # (B, 1)

    # ---- single shared-max logsumexp: exp(logits) computed ONCE ----
    m = jnp.max(logits)
    e = jnp.exp(logits - m)
    lse_r = m + jnp.log(jnp.sum(e, axis=1, keepdims=True))            # rows: CE(logits)
    lse_c = m + jnp.log(jnp.sum(e, axis=0, keepdims=True))            # cols: CE(logits.T)

    total = jnp.sum(lse_r) + jnp.sum(lse_c) - 2.0 * jnp.sum(diag)
    out_ref[0, 0] = total / (2.0 * B)


def crd_loss(s_feats, t_feats, ws, bs, wt, bt, temperature=0.07):
    B, DS = s_feats.shape
    _, DT = t_feats.shape
    OUT = ws.shape[1]

    # 1/T as a runtime SMEM scalar: changing T does not retrace/recompile.
    inv_t = jnp.asarray([1.0 / temperature], dtype=jnp.float32)

    vmem = pl.BlockSpec(memory_space=pltpu.MemorySpace.VMEM)
    smem = pl.BlockSpec(memory_space=pltpu.MemorySpace.SMEM)

    cost = pl.CostEstimate(
        flops=2 * (2 * B) * (DS + DT) * OUT      # block-diagonal projection
              + 2 * B * B * OUT                  # logits
              + 8 * B * OUT + 8 * B * B,         # norm / bias / softmax misc
        transcendentals=B * B + 4 * B,           # one exp slab + logs + rsqrt
        bytes_accessed=sum(int(a.size) * a.dtype.itemsize
                           for a in (s_feats, t_feats, ws, bs, wt, bt)) + 8,
    )

    out = pl.pallas_call(
        crd_loss_kernel,
        out_shape=jax.ShapeDtypeStruct((1, 1), jnp.float32),
        in_specs=[smem] + [vmem] * 6,
        out_specs=smem,
        cost_estimate=cost,
    )(inv_t, s_feats, t_feats, ws, bs, wt, bt)
    return out[0, 0]


def crd_loss_ref(s_feats, t_feats, ws, bs, wt, bt, temperature=0.07):
    s = s_feats @ ws + bs
    t = t_feats @ wt + bt
    s = s / jnp.linalg.norm(s, axis=1, keepdims=True)
    t = t / jnp.linalg.norm(t, axis=1, keepdims=True)
    logits_s = s @ t.T / temperature
    logits_t = logits_s.T
    gts = jnp.arange(s.shape[0])

    def ce(logits):
        logp = jax.nn.log_softmax(logits, axis=1)
        return -jnp.mean(logp[jnp.arange(logits.shape[0]), gts])

    return (ce(logits_s) + ce(logits_t)) / 2.0


if __name__ == "__main__":
    key = jax.random.PRNGKey(0)
    k1, k2, k3, k4, k5, k6 = jax.random.split(key, 6)

    B = 8          # batch size
    DS = 32        # student feature dim
    DT = 32        # teacher feature dim
    OUT = 128      # output_dim of CRD projection heads
    T = 0.07       # temperature

    s_feats = jax.random.normal(k1, (B, DS), dtype=jnp.float32)
    t_feats = jax.random.normal(k2, (B, DT), dtype=jnp.float32)

    # s_trans / t_trans = nn.Linear(in_dim, output_dim), deterministic init.
    ws = jax.random.normal(k3, (DS, OUT), dtype=jnp.float32) * 0.05
    bs = jax.random.normal(k4, (1, OUT), dtype=jnp.float32) * 0.01
    wt = jax.random.normal(k5, (DT, OUT), dtype=jnp.float32) * 0.05
    bt = jax.random.normal(k6, (1, OUT), dtype=jnp.float32) * 0.01

    loss = crd_loss(s_feats, t_feats, ws, bs, wt, bt, temperature=T)
    loss = jax.block_until_ready(loss)

    ref = crd_loss_ref(s_feats, t_feats, ws, bs, wt, bt, temperature=T)
    # bf16 MXU operands in the kernel vs. an f32 reference -> loosened tol.
    assert jnp.allclose(loss, ref, rtol=2e-2, atol=2e-2), (loss, ref)

    print("KERNEL_OK")
</pallas_src>

<mosaic_0001>
module attributes {stable_mosaic.version = 11 : i64} {
  func.func @crd_loss_kernel(%arg0: memref<1xf32, #tpu.memory_space<smem>>, %arg1: memref<8x32xf32, #tpu.memory_space<vmem>>, %arg2: memref<8x32xf32, #tpu.memory_space<vmem>>, %arg3: memref<32x128xf32, #tpu.memory_space<vmem>>, %arg4: memref<1x128xf32, #tpu.memory_space<vmem>>, %arg5: memref<32x128xf32, #tpu.memory_space<vmem>>, %arg6: memref<1x128xf32, #tpu.memory_space<vmem>>, %arg7: memref<1x1xf32, #tpu.memory_space<smem>>) attributes {dimension_semantics = [], scalar_prefetch = 0 : i64, scratch_operands = 0 : i64, tpu.core_type = #tpu.core_type<tc>} {
    %c0 = arith.constant 0 : index
    %c0_0 = arith.constant 0 : index
    %0 = vector.load %arg1[%c0, %c0_0] : memref<8x32xf32, #tpu.memory_space<vmem>>, vector<8x32xf32>
    %cst = arith.constant 0.000000e+00 : f32
    %1 = vector.broadcast %cst : f32 to vector<8x32xf32>
    %2 = tpu.concatenate %0, %1 in 1 : vector<8x32xf32>, vector<8x32xf32> -> vector<8x64xf32>
    %cst_1 = arith.constant 0.000000e+00 : f32
    %3 = vector.broadcast %cst_1 : f32 to vector<8x32xf32>
    %c0_2 = arith.constant 0 : index
    %c0_3 = arith.constant 0 : index
    %4 = vector.load %arg2[%c0_2, %c0_3] : memref<8x32xf32, #tpu.memory_space<vmem>>, vector<8x32xf32>
    %5 = tpu.concatenate %3, %4 in 1 : vector<8x32xf32>, vector<8x32xf32> -> vector<8x64xf32>
    %6 = tpu.concatenate %2, %5 in 0 : vector<8x64xf32>, vector<8x64xf32> -> vector<16x64xf32>
    %7 = arith.truncf %6 : vector<16x64xf32> to vector<16x64xbf16>
    %c0_4 = arith.constant 0 : index
    %c0_5 = arith.constant 0 : index
    %8 = vector.load %arg3[%c0_4, %c0_5] : memref<32x128xf32, #tpu.memory_space<vmem>>, vector<32x128xf32>
    %c0_6 = arith.constant 0 : index
    %c0_7 = arith.constant 0 : index
    %9 = vector.load %arg5[%c0_6, %c0_7] : memref<32x128xf32, #tpu.memory_space<vmem>>, vector<32x128xf32>
    %10 = tpu.concatenate %8, %9 in 0 : vector<32x128xf32>, vector<32x128xf32> -> vector<64x128xf32>
    %11 = arith.truncf %10 : vector<64x128xf32> to vector<64x128xbf16>
    %cst_8 = arith.constant dense<0.000000e+00> : vector<16x128xf32>
    %12 = tpu.matmul %7, %11, %cst_8 {dimension_numbers = #tpu.dot_dimension_numbers<[1], [0], [0], [1], [0, 0, 1, 1], [], []>} : vector<16x64xbf16>, vector<64x128xbf16>, vector<16x128xf32> -> vector<16x128xf32>
    %c0_9 = arith.constant 0 : index
    %c0_10 = arith.constant 0 : index
    %13 = vector.load %arg4[%c0_9, %c0_10] : memref<1x128xf32, #tpu.memory_space<vmem>>, vector<1x128xf32>
    %14 = vector.shape_cast %13 : vector<1x128xf32> to vector<1x128xf32>
    %15 = vector.broadcast %14 : vector<1x128xf32> to vector<8x128xf32>
    %c0_11 = arith.constant 0 : index
    %c0_12 = arith.constant 0 : index
    %16 = vector.load %arg6[%c0_11, %c0_12] : memref<1x128xf32, #tpu.memory_space<vmem>>, vector<1x128xf32>
    %17 = vector.shape_cast %16 : vector<1x128xf32> to vector<1x128xf32>
    %18 = vector.broadcast %17 : vector<1x128xf32> to vector<8x128xf32>
    %19 = tpu.concatenate %15, %18 in 0 : vector<8x128xf32>, vector<8x128xf32> -> vector<16x128xf32>
    %20 = arith.addf %12, %19 : vector<16x128xf32>
    %21 = arith.mulf %20, %20 : vector<16x128xf32>
    %cst_13 = arith.constant dense<0.000000e+00> : vector<16xf32>
    %22 = vector.multi_reduction <add>, %21, %cst_13 [1] : vector<16x128xf32> to vector<16xf32>
    %23 = vector.shape_cast %22 : vector<16xf32> to vector<16x1xf32>
    %cst_14 = arith.constant 9.99999996E-13 : f32
    %24 = vector.broadcast %cst_14 : f32 to vector<16x1xf32>
    %25 = arith.addf %23, %24 : vector<16x1xf32>
    %26 = math.rsqrt %25 : vector<16x1xf32>
    %27 = vector.broadcast %26 : vector<16x1xf32> to vector<16x128xf32>
    %28 = arith.mulf %20, %27 : vector<16x128xf32>
    %29 = arith.truncf %28 : vector<16x128xf32> to vector<16x128xbf16>
    %30 = vector.extract_strided_slice %29 {offsets = [0, 0], sizes = [8, 128], strides = [1, 1]} : vector<16x128xbf16> to vector<8x128xbf16>
    %31 = vector.extract_strided_slice %29 {offsets = [8, 0], sizes = [8, 128], strides = [1, 1]} : vector<16x128xbf16> to vector<8x128xbf16>
    %c0_15 = arith.constant 0 : index
    %32 = memref.load %arg0[%c0_15] : memref<1xf32, #tpu.memory_space<smem>>
    %cst_16 = arith.constant dense<0.000000e+00> : vector<8x8xf32>
    %33 = tpu.matmul %30, %31, %cst_16 {dimension_numbers = #tpu.dot_dimension_numbers<[1], [1], [0], [0], [0, 0, 1, 0], [], []>} : vector<8x128xbf16>, vector<8x128xbf16>, vector<8x8xf32> -> vector<8x8xf32>
    %34 = vector.broadcast %32 : f32 to vector<8x8xf32>
    %35 = arith.mulf %33, %34 : vector<8x8xf32>
    %36 = vector.extract_strided_slice %28 {offsets = [0, 0], sizes = [8, 128], strides = [1, 1]} : vector<16x128xf32> to vector<8x128xf32>
    %37 = vector.extract_strided_slice %28 {offsets = [8, 0], sizes = [8, 128], strides = [1, 1]} : vector<16x128xf32> to vector<8x128xf32>
    %38 = arith.mulf %36, %37 : vector<8x128xf32>
    %cst_17 = arith.constant dense<0.000000e+00> : vector<8xf32>
    %39 = vector.multi_reduction <add>, %38, %cst_17 [1] : vector<8x128xf32> to vector<8xf32>
    %40 = vector.shape_cast %39 : vector<8xf32> to vector<8x1xf32>
    %41 = vector.broadcast %32 : f32 to vector<8x1xf32>
    %42 = arith.mulf %40, %41 : vector<8x1xf32>
    %43 = vector.shape_cast %35 : vector<8x8xf32> to vector<1x8x8xf32>
    %cst_18 = arith.constant dense<0xFF800000> : vector<1xf32>
    %44 = vector.multi_reduction <maximumf>, %43, %cst_18 [1, 2] : vector<1x8x8xf32> to vector<1xf32>
    %45 = vector.shape_cast %44 : vector<1xf32> to vector<1x1x1xf32>
    %46 = vector.extract %45[0, 0, 0] : f32 from vector<1x1x1xf32>
    %47 = vector.broadcast %46 : f32 to vector<8x8xf32>
    %48 = arith.subf %35, %47 : vector<8x8xf32>
    %49 = math.exp %48 : vector<8x8xf32>
    %cst_19 = arith.constant dense<0.000000e+00> : vector<8xf32>
    %50 = vector.multi_reduction <add>, %49, %cst_19 [1] : vector<8x8xf32> to vector<8xf32>
    %51 = vector.shape_cast %50 : vector<8xf32> to vector<8x1xf32>
    %52 = math.log %51 : vector<8x1xf32>
    %53 = vector.broadcast %46 : f32 to vector<8x1xf32>
    %54 = arith.addf %53, %52 : vector<8x1xf32>
    %cst_20 = arith.constant dense<0.000000e+00> : vector<8xf32>
    %55 = vector.multi_reduction <add>, %49, %cst_20 [0] : vector<8x8xf32> to vector<8xf32>
    %56 = vector.shape_cast %55 : vector<8xf32> to vector<1x8xf32>
    %57 = math.log %56 : vector<1x8xf32>
    %58 = vector.broadcast %46 : f32 to vector<1x8xf32>
    %59 = arith.addf %58, %57 : vector<1x8xf32>
    %60 = vector.shape_cast %54 : vector<8x1xf32> to vector<1x8x1xf32>
    %cst_21 = arith.constant dense<0.000000e+00> : vector<1xf32>
    %61 = vector.multi_reduction <add>, %60, %cst_21 [1, 2] : vector<1x8x1xf32> to vector<1xf32>
    %62 = vector.shape_cast %61 : vector<1xf32> to vector<1x1x1xf32>
    %63 = vector.extract %62[0, 0, 0] : f32 from vector<1x1x1xf32>
    %64 = vector.shape_cast %59 : vector<1x8xf32> to vector<1x1x8xf32>
    %cst_22 = arith.constant dense<0.000000e+00> : vector<1xf32>
    %65 = vector.multi_reduction <add>, %64, %cst_22 [1, 2] : vector<1x1x8xf32> to vector<1xf32>
    %66 = vector.shape_cast %65 : vector<1xf32> to vector<1x1x1xf32>
    %67 = vector.extract %66[0, 0, 0] : f32 from vector<1x1x1xf32>
    %68 = arith.addf %63, %67 : f32
    %69 = vector.shape_cast %42 : vector<8x1xf32> to vector<1x8x1xf32>
    %cst_23 = arith.constant dense<0.000000e+00> : vector<1xf32>
    %70 = vector.multi_reduction <add>, %69, %cst_23 [1, 2] : vector<1x8x1xf32> to vector<1xf32>
    %71 = vector.shape_cast %70 : vector<1xf32> to vector<1x1x1xf32>
    %72 = vector.extract %71[0, 0, 0] : f32 from vector<1x1x1xf32>
    %cst_24 = arith.constant 2.000000e+00 : f32
    %73 = arith.mulf %cst_24, %72 : f32
    %74 = arith.subf %68, %73 : f32
    %cst_25 = arith.constant 1.600000e+01 : f32
    %75 = arith.divf %74, %cst_25 : f32
    %c0_26 = arith.constant 0 : index
    %c0_27 = arith.constant 0 : index
    %76 = memref.load %arg7[%c0_26, %c0_27] : memref<1x1xf32, #tpu.memory_space<smem>>
    memref.store %75, %arg7[%c0_26, %c0_27] : memref<1x1xf32, #tpu.memory_space<smem>>
    return
  }
}

</mosaic_0001>

<llo_original>
// kernel: tpu_custom_call.1
$region0: #{tpu_custom_call.1}
  #allocation0 [shape = 'u32[]', space=smem, size = 0x4, offset = 0x4, fixed_abs, tag = 'smem constant byte address 0x4 - core index']
  #allocation1 [shape = 'u32[72,128]{1,0:T(1,128)}', space=vmem, size = 0x9000, scoped, tag = 'internal scratch']
  #allocation2 [shape = 'f32[1]{0:T(128)S(6)}', space=smem, size = 0x200, scoped, tag = 'scoped memory for tpu_custom_call.1']
  %s0 = inlined_call_operand.<no memory space> [shape: f32[1], index: 0, kind: input, shape index: {}]
  %s1 = inlined_call_operand.hbm [shape: f32[8,32], index: 1, kind: input, shape index: {}]
  %s2 = inlined_call_operand.hbm [shape: f32[8,32], index: 2, kind: input, shape index: {}]
  %s3 = inlined_call_operand.hbm [shape: f32[32,128], index: 3, kind: input, shape index: {}]
  %s4 = inlined_call_operand.vmem [shape: f32[1,128], index: 4, kind: input, shape index: {}]
  %s5 = inlined_call_operand.hbm [shape: f32[32,128], index: 5, kind: input, shape index: {}]
  %s6 = inlined_call_operand.vmem [shape: f32[1,128], index: 6, kind: input, shape index: {}]
  %s7 = inlined_call_operand.hbm [shape: f32[1,1], index: 7, kind: output, shape index: {}]
  %s8 = sld [smem:[#allocation0]]
  $region54: #{tpu_custom_call.1} parent=0
    _
  %s10 = ssub.s32 1, %s8
  %s11 = scalar_select 0, %s10, %s8
  %12 = sst [smem:[#allocation2]] %s0
  $region1: #{tpu_custom_call.1} parent=0
    #allocation3 [shape = 'u8[4096]{0}', space=vmem, size = 0x1000, scoped, tag = 'input window, operand 1, single buffered']
    #allocation4 [shape = 's32[1]{0}', space=sflag, size = 0x4, scoped, tag = 'scoped memory for tpu_custom_call.1']
    #allocation5 [shape = 's32[1]{0}', space=sflag, size = 0x4, scoped, tag = 'scoped memory for tpu_custom_call.1']
    #allocation6 [shape = 'u8[4096]{0}', space=vmem, size = 0x1000, scoped, tag = 'input window, operand 2, single buffered']
    #allocation7 [shape = 's32[1]{0}', space=sflag, size = 0x4, scoped, tag = 'scoped memory for tpu_custom_call.1']
    #allocation8 [shape = 'u8[16384]{0}', space=vmem, size = 0x4000, scoped, tag = 'input window, operand 3, single buffered']
    #allocation9 [shape = 'u8[16384]{0}', space=vmem, size = 0x4000, scoped, tag = 'input window, operand 5, single buffered']
    #allocation10 [shape = 's32[1]{0}', space=sflag, size = 0x4, scoped, tag = 'scoped memory for tpu_custom_call.1']
    #allocation11 [shape = 'u8[512]{0}', space=smem, size = 0x200, scoped, tag = 'output window, operand 0, single buffered']
    %13 = vsyncpa [#allocation4], 0
    %14 = vsyncpa [#allocation7], 0
    %15 = vsyncpa [#allocation10], 0
    %16 = vsyncpa [#allocation5], 0
    // Predicated region
    $region2: #{tpu_custom_call.1} parent=1 // pred_check
      _
    $region3: #{tpu_custom_call.1} parent=1 // pred_check_branch
      %18 = sbr.rel (0) target = $region5
    $region4: #{tpu_custom_call.1} parent=1 // pred_region
      _
    $region5: #{tpu_custom_call.1} parent=1 // pred_fallthru
      _
    // Predicated region
    $region6: #{tpu_custom_call.1} parent=1 // pred_check
      _
    $region7: #{tpu_custom_call.1} parent=1 // pred_check_branch
      %20 = sbr.rel (0) target = $region9
    $region8: #{tpu_custom_call.1} parent=1 // pred_region
      %22 = vsyncadd [#allocation4], 0
      %s24 = sshll.u32 %s1, 4
      %s25 = int_to_ptr.hbm [resolvable:$true] %s24
      %s26 = sshll.u32 [#allocation3], 4
      %s27 = int_to_ptr.vmem [resolvable:$true] %s26
      %29 = dma.hbm_to_vmem [thread:$0]  %s25, 128, %s27, [#allocation4]
    $region9: #{tpu_custom_call.1} parent=1 // pred_fallthru
      _
    // Predicated region
    $region10: #{tpu_custom_call.1} parent=1 // pred_check
      _
    $region11: #{tpu_custom_call.1} parent=1 // pred_check_branch
      %31 = sbr.rel (0) target = $region13
    $region12: #{tpu_custom_call.1} parent=1 // pred_region
      %33 = vsyncadd [#allocation7], 0
      %s35 = sshll.u32 %s2, 4
      %s36 = int_to_ptr.hbm [resolvable:$true] %s35
      %s37 = sshll.u32 [#allocation6], 4
      %s38 = int_to_ptr.vmem [resolvable:$true] %s37
      %40 = dma.hbm_to_vmem [thread:$0]  %s36, 128, %s38, [#allocation7]
    $region13: #{tpu_custom_call.1} parent=1 // pred_fallthru
      _
    // Predicated region
    $region14: #{tpu_custom_call.1} parent=1 // pred_check
      _
    $region15: #{tpu_custom_call.1} parent=1 // pred_check_branch
      %42 = sbr.rel (0) target = $region17
    $region16: #{tpu_custom_call.1} parent=1 // pred_region
      %44 = vsyncadd [#allocation7], 0
      %s45 = sshll.u32 %s3, 4
      %s46 = int_to_ptr.hbm [resolvable:$true] %s45
      %s47 = sshll.u32 [#allocation8], 4
      %s48 = int_to_ptr.vmem [resolvable:$true] %s47
      %53 = dma.hbm_to_vmem [thread:$0]  %s46, 512, %s48, [#allocation7], 128, 128, 8
    $region17: #{tpu_custom_call.1} parent=1 // pred_fallthru
      _
    // Predicated region
    $region18: #{tpu_custom_call.1} parent=1 // pred_check
      _
    $region19: #{tpu_custom_call.1} parent=1 // pred_check_branch
      %55 = sbr.rel (0) target = $region21
    $region20: #{tpu_custom_call.1} parent=1 // pred_region
      _
    $region21: #{tpu_custom_call.1} parent=1 // pred_fallthru
      _
    // Predicated region
    $region22: #{tpu_custom_call.1} parent=1 // pred_check
      _
    $region23: #{tpu_custom_call.1} parent=1 // pred_check_branch
      %57 = sbr.rel (0) target = $region25
    $region24: #{tpu_custom_call.1} parent=1 // pred_region
      %59 = vsyncadd [#allocation10], 0
      %s60 = sshll.u32 %s5, 4
      %s61 = int_to_ptr.hbm [resolvable:$true] %s60
      %s62 = sshll.u32 [#allocation9], 4
      %s63 = int_to_ptr.vmem [resolvable:$true] %s62
      %68 = dma.hbm_to_vmem [thread:$0]  %s61, 512, %s63, [#allocation10], 128, 128, 8
    $region25: #{tpu_custom_call.1} parent=1 // pred_fallthru
      _
    // Predicated region
    $region26: #{tpu_custom_call.1} parent=1 // pred_check
      _
    $region27: #{tpu_custom_call.1} parent=1 // pred_check_branch
      %70 = sbr.rel (0) target = $region29
    $region28: #{tpu_custom_call.1} parent=1 // pred_region
      _
    $region29: #{tpu_custom_call.1} parent=1 // pred_fallthru
      _
    // Predicated region
    $region30: #{tpu_custom_call.1} parent=1 // pred_check
      _
    $region31: #{tpu_custom_call.1} parent=1 // pred_check_branch
      %72 = sbr.rel (0) target = $region33
    $region32: #{tpu_custom_call.1} parent=1 // pred_region
      %74 = dma.done [#allocation4], 128
    $region33: #{tpu_custom_call.1} parent=1 // pred_fallthru
      _
    // Predicated region
    $region34: #{tpu_custom_call.1} parent=1 // pred_check
      _
    $region35: #{tpu_custom_call.1} parent=1 // pred_check_branch
      %76 = sbr.rel (0) target = $region37
    $region36: #{tpu_custom_call.1} parent=1 // pred_region
      %78 = dma.done [#allocation7], 128
    $region37: #{tpu_custom_call.1} parent=1 // pred_fallthru
      _
    // Predicated region
    $region38: #{tpu_custom_call.1} parent=1 // pred_check
      _
    $region39: #{tpu_custom_call.1} parent=1 // pred_check_branch
      %80 = sbr.rel (0) target = $region41
    $region40: #{tpu_custom_call.1} parent=1 // pred_region
      %82 = dma.done [#allocation7], 512
    $region41: #{tpu_custom_call.1} parent=1 // pred_fallthru
      _
    // Predicated region
    $region42: #{tpu_custom_call.1} parent=1 // pred_check
      _
    $region43: #{tpu_custom_call.1} parent=1 // pred_check_branch
      %84 = sbr.rel (0) target = $region45
    $region44: #{tpu_custom_call.1} parent=1 // pred_region
      %86 = dma.done [#allocation10], 512
    $region45: #{tpu_custom_call.1} parent=1 // pred_fallthru
      _
    %v88 = vld [vmem:[#allocation3] sm:$0xff]
    %vm89 = vcmask 261120
    %v90 = vsel %vm89, %v88, 0.0
    %v91 = vld [vmem:[#allocation6] sm:$0xff]
    %93 = vrot.lane.b32.xlu0 %v91, 32
    %v94 = vpop.permute.xlu0 %93
    %v96 = vsel %vm89, 0.0, %v94
    %v97 = vpack.c.bf16 %v96, %v90
    %v98 = vld [vmem:[#allocation8] sm:$0xff]
    %v99 = vld [vmem:[#allocation8 + $0x8] sm:$0xff]
    %v100 = vld [vmem:[#allocation8 + $0x10] sm:$0xff]
    %v101 = vld [vmem:[#allocation8 + $0x18] sm:$0xff]
    %v102 = vld [vmem:[#allocation9] sm:$0xff]
    %v103 = vld [vmem:[#allocation9 + $0x8] sm:$0xff]
    %v104 = vld [vmem:[#allocation9 + $0x10] sm:$0xff]
    %v105 = vld [vmem:[#allocation9 + $0x18] sm:$0xff]
    %v106 = vpack.c.bf16 %v99, %v98
    %v107 = vpack.c.bf16 %v101, %v100
    %v108 = vpack.c.bf16 %v103, %v102
    %v109 = vpack.c.bf16 %v105, %v104
    %v110 = vld [vmem:[%s4] sm:$0x1]
    %v112 = vperm.slane %v110, 0
    %v114 = vld [vmem:[%s6] sm:$0x1]
    %v116 = vperm.slane %v114, 0
    %vm118 = vcmask 523264
    %v120 = vsel %vm118, %v97, 0
    %122 = vmatpush.bf16.msra.mxu0 0
    %123 = vmatpush.bf16.msra.mxu0 0
    %124 = vmatpush.bf16.msra.mxu0 0
    %125 = vmatpush.bf16.msra.mxu0 0
    %126 = vmatpush.bf16.msra.mxu0 %v109
    %127 = vmatpush.bf16.msra.mxu0 %v108
    %128 = vmatpush.bf16.msra.mxu0 %v107
    %129 = vmatpush.bf16.msra.mxu0 %v106
    %130 = vmatmul.bf16.gmra.mxu0 %v120
    %v131 = vpop.f32.mrf.mxu0
    %v132 = vadd.f32 %v112, %v131
    %v133 = vpop.f32.mrf.mxu0
    %v134 = vadd.f32 %v116, %v133
    %135 = vdwg.mxu0
    %v136 = vmul.f32 %v132, %v132
    %v137 = vmul.f32 %v134, %v134
    %138 = vadd.xlane.f32.xlu0 %v136
    %v139 = vpop.xlane.xlu0 %138
    %140 = vadd.xlane.f32.xlu0 %v137
    %v141 = vpop.xlane.xlu0 %140
    %v142 = vadd.f32 %v139, 1e-12
    %v143 = vadd.f32 %v141, 1e-12
    %v144 = vrsqrt.pop %v142
    %v145 = vmul.f32 %v144, %v142
    %v146 = vmul.f32 %v145, %v144
    %v147 = vmul.f32 0.5, %v146
    %v148 = vsub.f32 1.5, %v147
    %v149 = vmul.f32 %v144, %v148
    %vm150 = vweird.f32 %v142
    %vm151 = vweird.f32 %v144
    %vm152 = vmor %vm150, %vm151
    %v153 = vsel %vm152, %v144, %v149
    %v154 = vrsqrt.pop %v143
    %v155 = vmul.f32 %v154, %v143
    %v156 = vmul.f32 %v155, %v154
    %v157 = vmul.f32 0.5, %v156
    %v158 = vsub.f32 1.5, %v157
    %v159 = vmul.f32 %v154, %v158
    %vm160 = vweird.f32 %v143
    %vm161 = vweird.f32 %v154
    %vm162 = vmor %vm160, %vm161
    %v163 = vsel %vm162, %v154, %v159
    %v164 = vmul.f32 %v132, %v153
    %v165 = vmul.f32 %v134, %v163
    %v166 = vpack.c.bf16 %v164, %v164
    %v167 = vpack.c.bf16 %v165, %v165
    %s168 = sld [smem:[#allocation2]]
    %169 = vmatpush.bf16.xpose.msra.mxu0 0
    %170 = vmatpush.bf16.xpose.msra.mxu0 0
    %171 = vmatpush.bf16.xpose.msra.mxu0 0
    %172 = vmatpush.bf16.xpose.msra.mxu0 0
    %173 = vmatpush.bf16.xpose.msra.mxu0 0
    %174 = vmatpush.bf16.xpose.msra.mxu0 0
    %175 = vmatpush.bf16.xpose.msra.mxu0 0
    %176 = vmatpush.bf16.xpose.msra.mxu0 %v167
    %177 = vmatmul.bf16.gmra.mxu0 %v166
    %v178 = vpop.f32.mrf.mxu0
    %v179 = vadd.f32 0.0, %v178
    %v180 = vpop.f32.mrf.mxu0
    %181 = vdwg.mxu0
    %v182 = vstv %s168
    %v183 = vmul.f32 %v179, %v182
    %v184 = vmul.f32 %v164, %v165
    %185 = vadd.xlane.f32.xlu0 %v184
    %v186 = vpop.xlane.xlu0 %185
    %v187 = vmul.f32 %v186, %v182
    %vm188 = vcmask 64512
    %v189 = vsel %vm188, %v183, -inf
    %190 = vmax.xlane.f32.xlu0 %v189
    %v191 = vpop.xlane.xlu0 %190
    %v192 = vrot.slane %v191, 4
    %v193 = vmax.f32 %v191, %v192
    %v194 = vrot.slane %v193, 2
    %v195 = vmax.f32 %v193, %v194
    %v196 = vrot.slane %v195, 1
    %v197 = vmax.f32 %v195, %v196
    %s198 = vtos %v197
    %v199 = vstv %s198
    %v200 = vsub.f32 %v183, %v199
    %v201 = vmul.f32 %v200, 1.442695
    %v202 = vpow.pop %v201
    %v203 = vsel %vm188, %v202, 0.0
    %204 = vadd.xlane.f32.xlu0 %v203
    %v205 = vpop.xlane.xlu0 %204
    %v206 = vlog2.pop %v205
    %v207 = vmul.f32 %v206, 0.6931472
    %v208 = vadd.f32 %v199, %v207
    %v209 = vrot.slane %v203, 4
    %v210 = vadd.f32 %v203, %v209
    %v211 = vrot.slane %v210, 2
    %v212 = vadd.f32 %v210, %v211
    %v213 = vrot.slane %v212, 1
    %v214 = vadd.f32 %v212, %v213
    %v215 = vlog2.pop %v214
    %v216 = vmul.f32 %v215, 0.6931472
    %v217 = vadd.f32 %v199, %v216
    %vm218 = vcmask 7168
    %v219 = vsel %vm218, %v208, 0.0
    %220 = vadd.xlane.f32.xlu0 %v219
    %v221 = vpop.xlane.xlu0 %220
    %v222 = vrot.slane %v221, 4
    %v223 = vadd.f32 %v221, %v222
    %v224 = vrot.slane %v223, 2
    %v225 = vadd.f32 %v223, %v224
    %v226 = vrot.slane %v225, 1
    %v227 = vadd.f32 %v225, %v226
    %s228 = vtos %v227
    %vm229 = vcmask 57344
    %v230 = vsel %vm229, %v217, 0.0
    %231 = vadd.xlane.f32.xlu0 %v230
    %v232 = vpop.xlane.xlu0 %231
    %v233 = vrot.slane %v232, 4
    %v234 = vadd.f32 %v232, %v233
    %v235 = vrot.slane %v234, 2
    %v236 = vadd.f32 %v234, %v235
    %v237 = vrot.slane %v236, 1
    %v238 = vadd.f32 %v236, %v237
    %s239 = vtos %v238
    %s240 = sadd.f32 %s228, %s239
    %v241 = vsel %vm218, %v187, 0.0
    %242 = vadd.xlane.f32.xlu0 %v241
    %v243 = vpop.xlane.xlu0 %242
    %v244 = vrot.slane %v243, 4
    %v245 = vadd.f32 %v243, %v244
    %v246 = vrot.slane %v245, 2
    %v247 = vadd.f32 %v245, %v246
    %v248 = vrot.slane %v247, 1
    %v249 = vadd.f32 %v247, %v248
    %s250 = vtos %v249
    %s251 = smul.f32 %s250, 2.0
    %s252 = ssub.f32 %s240, %s251
    %v253 = vrcp.pop 16.0
    %v254 = vmul.f32 16.0, %v253
    %v255 = vsub.f32 1.0, %v254
    %v256 = vmul.f32 %v253, %v255
    %v257 = vadd.f32 %v253, %v256
    %vm258 = vweird.f32 %v253
    %v259 = vsel %vm258, %v253, %v257
    %s260 = vtos %v259
    %s261 = smul.f32 %s252, %s260
    %s262 = scalar_lea.smem [#allocation11], 0
    %263 = sst [smem:[%s262]] %s261
    // Predicated region
    $region46: #{tpu_custom_call.1} parent=1 // pred_check
      _
    $region47: #{tpu_custom_call.1} parent=1 // pred_check_branch
      %265 = sbr.rel (0) target = $region49
    $region48: #{tpu_custom_call.1} parent=1 // pred_region
      %267 = vsyncadd [#allocation5], 0
      %s269 = sshll.u32 %s7, 4
      %s270 = int_to_ptr.hbm [resolvable:$true] %s269
      %272 = dma.smem_to_hbm [#allocation11], 16, %s270, [#allocation5]
    $region49: #{tpu_custom_call.1} parent=1 // pred_fallthru
      _
    // Predicated region
    $region50: #{tpu_custom_call.1} parent=1 // pred_check
      _
    $region51: #{tpu_custom_call.1} parent=1 // pred_check_branch
      %274 = sbr.rel (0) target = $region53
    $region52: #{tpu_custom_call.1} parent=1 // pred_region
      %276 = dma.done [#allocation5], 16
    $region53: #{tpu_custom_call.1} parent=1 // pred_fallthru
      _
    %277 = sfence
    %278 = vsyncpa [#allocation4], 1
    %279 = vsyncpa [#allocation7], 1
    %280 = vsyncpa [#allocation10], 1
    %281 = vsyncpa [#allocation5], 1

</llo_original>
